<compile_context>
chip_gen: v5e
topology: v5e:2x2
jax: 0.10.0
libtpu: 0.0.40
codegen_flags: <defaults>
</compile_context>

<pallas_src>
import jax
import jax.numpy as jnp
from jax import lax
from jax.experimental import pallas as pl
from jax.experimental.pallas import tpu as pltpu


def resblock_kernel(x_ref, w1_ref, w2_ref, p_ref, out_ref):
    """Process one (R, L) slab: R = nb*C rows (nb batch elems x C channels).

    x_ref  : (R, L)     activations, f32
    w1_ref : (3, R, R)  conv1 per-tap block-diagonal weights (bn2 folded in)
    w2_ref : (3, R, R)  conv2 per-tap block-diagonal weights
    p_ref  : (R, 4)     packed per-row params [s1, t1, b1', b2], f32
    """
    x = x_ref[...]
    L = x.shape[1]
    cdt = w1_ref.dtype                     # conv (MXU) dtype, bf16 by default

    s1 = p_ref[:, 0:1]
    t1 = p_ref[:, 1:2]
    b1 = p_ref[:, 2:3]
    b2 = p_ref[:, 3:4]

    # Padding masks for the "same" k=3 conv: zero the single column that wraps
    # around when rolling along L (rolls stay within a row => no cross-batch
    # contamination). Computed once per grid step on a (1, L) iota -- cheap.
    lane = lax.broadcasted_iota(jnp.int32, (1, L), 1)
    mprev = (lane != 0).astype(cdt)        # kills wrapped x[l-1] at l == 0
    mnext = (lane != L - 1).astype(cdt)    # kills wrapped x[l+1] at l == L-1

    def conv3(h, w_ref, bias):
        # k=3 "same" conv as three accumulating MXU dots against static
        # per-tap weight slices -- no (3R, L) stacked-operand materialization.
        hc = h.astype(cdt)
        prev = pltpu.roll(hc, shift=1, axis=1) * mprev       # x[l-1]
        nxt = pltpu.roll(hc, shift=L - 1, axis=1) * mnext    # x[l+1]
        y = jnp.dot(w_ref[0], prev, preferred_element_type=jnp.float32)
        y = y + jnp.dot(w_ref[1], hc, preferred_element_type=jnp.float32)
        y = y + jnp.dot(w_ref[2], nxt, preferred_element_type=jnp.float32)
        return y + bias

    # bn1 (folded) + relu   (dropout == identity in eval mode)
    h = jnp.maximum(x * s1 + t1, 0.0)
    # conv1 (with bn2 folded in) + relu
    h = jnp.maximum(conv3(h, w1_ref, b1), 0.0)
    # conv2
    h = conv3(h, w2_ref, b2)
    # residual add (Identity shortcut, strides == 1) + relu
    out_ref[...] = jnp.maximum(h + x, 0.0)


def _choose_nb(N, C, L, budget_bytes, max_rows=256):
    """Batch elements per grid step.

    Constraints: nb divides N; block rows nb*C sublane-legal (%8 or full);
    x block fits the VMEM budget; nb*C <= max_rows when stacking (bounds the
    MXU waste of the block-diagonal trick); prefer grid >= 2 and even so the
    parallel axis shards across both v7x TensorCores, then the largest nb.
    """
    divisors = [d for d in range(1, N + 1) if N % d == 0]
    legal = [d for d in divisors if (d * C) % 8 == 0 or d == N]
    valid = [d for d in legal
             if (d == 1 or d * C <= max_rows) and d * C * L * 4 <= budget_bytes]
    if not valid:
        # TODO(synk): tile L with 1-column halos / pad rows instead of
        #             oversizing a single block when nothing fits the budget.
        return min(legal) if legal else N

    def pref(d):
        g = N // d
        return (g >= 2 or N == 1, g >= 2 and g % 2 == 0, d)

    return max(valid, key=pref)


def resblock_pallas(x, params, strides=1, conv_dtype=jnp.bfloat16):
    assert strides == 1, "TODO(synk): strides != 1 (1x1 shortcut conv) not implemented"
    N, C, L = x.shape
    eps = 1e-5
    x = x.astype(jnp.float32)

    # ---- fold BN params (eval mode) -------------------------------------
    inv1 = params["bn1_gamma"] * lax.rsqrt(params["bn1_var"] + eps)
    s1 = inv1
    t1 = params["bn1_beta"] - params["bn1_mean"] * inv1
    inv2 = params["bn2_gamma"] * lax.rsqrt(params["bn2_var"] + eps)
    s2 = inv2
    t2 = params["bn2_beta"] - params["bn2_mean"] * inv2

    # ---- fold bn2 into conv1:  relu(bn2(conv1(h))) == relu(W1' h + b1') --
    w1 = params["conv1_w"] * s2[:, None, None]          # (C, C, 3)
    b1 = s2 * params["conv1_b"] + t2
    w2 = params["conv2_w"]
    b2 = params["conv2_b"]

    # ---- block sizing from the real VMEM budget -------------------------
    try:
        vmem_bytes = int(pltpu.get_tpu_info().vmem_capacity_bytes)
    except Exception:
        vmem_bytes = 64 << 20                            # conservative (v7x)
    # x block target ~ VMEM/24 (double-buffered in/out + bf16 temps + f32 dot
    # outputs expand the block ~10-12x in-kernel), clamped to 2..8 MiB.
    budget = min(max(vmem_bytes // 24, 2 << 20), 8 << 20)
    nb = _choose_nb(N, C, L, budget)
    R = nb * C
    grid = (N // nb,)

    # ---- block-diagonal per-tap weights ----------------------------------
    # kron(I_nb, W_tap): one (R, R) x (R, L) dot handles all nb batch elements
    # stacked on sublanes; tap t pairs with x[l-1+t].
    eye = jnp.eye(nb, dtype=jnp.float32)

    def big(w):                                          # (C, C, 3) -> (3, R, R)
        return jnp.stack([jnp.kron(eye, w[:, :, t]) for t in range(3)], axis=0)

    w1b = big(w1).astype(conv_dtype)
    w2b = big(w2).astype(conv_dtype)

    # packed per-row params [s1, t1, b1', b2], tiled to the block's nb*C rows
    pvec = jnp.tile(jnp.stack([s1, t1, b1, b2], axis=1).astype(jnp.float32),
                    (nb, 1))                             # (R, 4)

    # Free major-dim reshape (no transpose, no extra HBM pass): rows = n*C + c.
    x2 = x.reshape(N * C, L)

    x_spec = pl.BlockSpec((R, L), lambda i: (i, 0))
    w_spec = pl.BlockSpec((3, R, R), lambda i: (0, 0, 0),
                          pipeline_mode=pl.Buffered(1))   # constant: single-buffer
    p_spec = pl.BlockSpec((R, 4), lambda i: (0, 0),
                          pipeline_mode=pl.Buffered(1))

    itemsize = jnp.dtype(conv_dtype).itemsize
    flops = int(2 * 6 * R * R * L * (N // nb))            # 3 taps x 2 convs
    bytes_accessed = int(2 * N * C * L * 4                 # x in + out (f32)
                         + 2 * 3 * R * R * itemsize        # weights
                         + R * 4 * 4)                      # packed params

    out2 = pl.pallas_call(
        resblock_kernel,
        out_shape=jax.ShapeDtypeStruct((N * C, L), jnp.float32),
        grid_spec=pltpu.PrefetchScalarGridSpec(
            num_scalar_prefetch=0,
            grid=grid,
            in_specs=[x_spec, w_spec, w_spec, p_spec],
            out_specs=x_spec,
        ),
        compiler_params=pltpu.CompilerParams(
            dimension_semantics=("parallel",),
            vmem_limit_bytes=int(min(vmem_bytes * 3 // 4, 96 << 20)),
        ),
        cost_estimate=pl.CostEstimate(
            flops=flops, transcendentals=0, bytes_accessed=bytes_accessed),
    )(x2, w1b, w2b, pvec)

    return out2.reshape(N, C, L)


def resblock_ref(x, params):
    """Pure-JAX reference (eval-mode PyTorch ResBlock, strides=1)."""
    eps = 1e-5

    def bn(h, g, b, m, v):
        return (h - m[None, :, None]) / jnp.sqrt(v[None, :, None] + eps) \
            * g[None, :, None] + b[None, :, None]

    def conv(h, w, b):
        y = lax.conv_general_dilated(
            h, w, window_strides=(1,), padding=[(1, 1)],
            dimension_numbers=("NCH", "OIH", "NCH"))
        return y + b[None, :, None]

    identity = x
    h = jax.nn.relu(bn(x, params["bn1_gamma"], params["bn1_beta"],
                       params["bn1_mean"], params["bn1_var"]))
    h = conv(h, params["conv1_w"], params["conv1_b"])
    h = jax.nn.relu(bn(h, params["bn2_gamma"], params["bn2_beta"],
                       params["bn2_mean"], params["bn2_var"]))
    h = conv(h, params["conv2_w"], params["conv2_b"])
    return jax.nn.relu(h + identity)


def make_params(key, C):
    ks = jax.random.split(key, 10)
    return {
        "conv1_w": jax.random.normal(ks[0], (C, C, 3), jnp.float32) * 0.2,
        "conv1_b": jax.random.normal(ks[1], (C,), jnp.float32) * 0.1,
        "conv2_w": jax.random.normal(ks[2], (C, C, 3), jnp.float32) * 0.2,
        "conv2_b": jax.random.normal(ks[3], (C,), jnp.float32) * 0.1,
        "bn1_gamma": 1.0 + 0.1 * jax.random.normal(ks[4], (C,), jnp.float32),
        "bn1_beta": 0.1 * jax.random.normal(ks[5], (C,), jnp.float32),
        "bn1_mean": 0.1 * jax.random.normal(ks[6], (C,), jnp.float32),
        "bn1_var": 0.5 + jax.random.uniform(ks[7], (C,), jnp.float32),
        "bn2_gamma": 1.0 + 0.1 * jax.random.normal(ks[8], (C,), jnp.float32),
        "bn2_beta": 0.1 * jax.random.normal(ks[9], (C,), jnp.float32),
        "bn2_mean": jnp.zeros((C,), jnp.float32),
        "bn2_var": jnp.ones((C,), jnp.float32),
    }


if __name__ == "__main__":
    N, C, L = 2, 8, 128   # batch, filter_nums, sequence length
    key = jax.random.PRNGKey(0)
    kx, kp = jax.random.split(key)
    x = jax.random.normal(kx, (N, C, L), jnp.float32)
    params = make_params(kp, C)

    ref = resblock_ref(x, params)

    # f32 MXU path: tight correctness check against the pure-JAX reference.
    out_f32 = jax.block_until_ready(
        resblock_pallas(x, params, strides=1, conv_dtype=jnp.float32))
    assert out_f32.shape == (N, C, L)
    err32 = float(jnp.max(jnp.abs(out_f32 - ref)))
    assert err32 < 1e-3, f"f32 path max err {err32}"

    # bf16 MXU path (default / fast): looser tolerance for bf16 conv operands.
    out_bf16 = jax.block_until_ready(resblock_pallas(x, params, strides=1))
    assert out_bf16.shape == (N, C, L)
    errbf = float(jnp.max(jnp.abs(out_bf16 - ref)))
    assert errbf < 5e-2, f"bf16 path max err {errbf}"

    print("KERNEL_OK")
</pallas_src>

<mosaic_0001>
module attributes {stable_mosaic.version = 11 : i64} {
  func.func @resblock_kernel(%arg0: i32, %arg1: memref<8x128xf32, #tpu.memory_space<vmem>>, %arg2: memref<3x8x8xf32, #tpu.memory_space<vmem>>, %arg3: memref<3x8x8xf32, #tpu.memory_space<vmem>>, %arg4: memref<8x4xf32, #tpu.memory_space<vmem>>, %arg5: memref<8x128xf32, #tpu.memory_space<vmem>>) attributes {dimension_semantics = [#tpu.dimension_semantics<parallel>], iteration_bounds = array<i64: 2>, scalar_prefetch = 0 : i64, scratch_operands = 0 : i64, tpu.core_type = #tpu.core_type<tc>, window_params = [{transform_indices = @transform_0, window_bounds = array<i64: 8, 128>}, {pipeline_mode = #tpu.pipeline_mode<synchronous>, transform_indices = @transform_1, window_bounds = array<i64: 3, 8, 8>}, {pipeline_mode = #tpu.pipeline_mode<synchronous>, transform_indices = @transform_2, window_bounds = array<i64: 3, 8, 8>}, {pipeline_mode = #tpu.pipeline_mode<synchronous>, transform_indices = @transform_3, window_bounds = array<i64: 8, 4>}, {transform_indices = @transform_4, window_bounds = array<i64: 8, 128>}]} {
    %c0 = arith.constant 0 : index
    %c0_0 = arith.constant 0 : index
    %0 = vector.load %arg1[%c0, %c0_0] : memref<8x128xf32, #tpu.memory_space<vmem>>, vector<8x128xf32>
    %c0_1 = arith.constant 0 : index
    %c0_2 = arith.constant 0 : index
    %1 = vector.load %arg4[%c0_1, %c0_2] : memref<8x4xf32, #tpu.memory_space<vmem>>, vector<8x1xf32>
    %c0_3 = arith.constant 0 : index
    %c1 = arith.constant 1 : index
    %2 = vector.load %arg4[%c0_3, %c1] : memref<8x4xf32, #tpu.memory_space<vmem>>, vector<8x1xf32>
    %c0_4 = arith.constant 0 : index
    %c2 = arith.constant 2 : index
    %3 = vector.load %arg4[%c0_4, %c2] : memref<8x4xf32, #tpu.memory_space<vmem>>, vector<8x1xf32>
    %c0_5 = arith.constant 0 : index
    %c3 = arith.constant 3 : index
    %4 = vector.load %arg4[%c0_5, %c3] : memref<8x4xf32, #tpu.memory_space<vmem>>, vector<8x1xf32>
    %5 = tpu.iota {dimensions = array<i32: 1>} : vector<1x128xi32>
    %c0_i32 = arith.constant 0 : i32
    %6 = vector.broadcast %c0_i32 : i32 to vector<1x128xi32>
    %7 = arith.cmpi ne, %5, %6 : vector<1x128xi32>
    %8 = arith.extui %7 : vector<1x128xi1> to vector<1x128xi32>
    %9 = arith.sitofp %8 : vector<1x128xi32> to vector<1x128xf32>
    %c127_i32 = arith.constant 127 : i32
    %10 = vector.broadcast %c127_i32 : i32 to vector<1x128xi32>
    %11 = arith.cmpi ne, %5, %10 : vector<1x128xi32>
    %12 = arith.extui %11 : vector<1x128xi1> to vector<1x128xi32>
    %13 = arith.sitofp %12 : vector<1x128xi32> to vector<1x128xf32>
    %14 = vector.broadcast %1 : vector<8x1xf32> to vector<8x128xf32>
    %15 = arith.mulf %0, %14 : vector<8x128xf32>
    %16 = vector.broadcast %2 : vector<8x1xf32> to vector<8x128xf32>
    %17 = arith.addf %15, %16 : vector<8x128xf32>
    %cst = arith.constant 0.000000e+00 : f32
    %18 = vector.broadcast %cst : f32 to vector<8x128xf32>
    %19 = arith.maximumf %17, %18 : vector<8x128xf32>
    %c1_i32 = arith.constant 1 : i32
    %20 = tpu.dynamic_rotate %19 by %c1_i32 dim 1 : vector<8x128xf32>, i32 -> vector<8x128xf32>
    %21 = vector.broadcast %9 : vector<1x128xf32> to vector<8x128xf32>
    %22 = arith.mulf %20, %21 : vector<8x128xf32>
    %c127_i32_6 = arith.constant 127 : i32
    %23 = tpu.dynamic_rotate %19 by %c127_i32_6 dim 1 : vector<8x128xf32>, i32 -> vector<8x128xf32>
    %24 = vector.broadcast %13 : vector<1x128xf32> to vector<8x128xf32>
    %25 = arith.mulf %23, %24 : vector<8x128xf32>
    %c0_7 = arith.constant 0 : index
    %c0_8 = arith.constant 0 : index
    %c0_9 = arith.constant 0 : index
    %26 = vector.load %arg2[%c0_7, %c0_8, %c0_9] : memref<3x8x8xf32, #tpu.memory_space<vmem>>, vector<1x8x8xf32>
    %27 = vector.shape_cast %26 : vector<1x8x8xf32> to vector<8x8xf32>
    %cst_10 = arith.constant dense<0.000000e+00> : vector<8x128xf32>
    %28 = tpu.matmul %27, %22, %cst_10 {dimension_numbers = #tpu.dot_dimension_numbers<[1], [0], [0], [1], [0, 0, 1, 1], [], []>} : vector<8x8xf32>, vector<8x128xf32>, vector<8x128xf32> -> vector<8x128xf32>
    %c1_11 = arith.constant 1 : index
    %c0_12 = arith.constant 0 : index
    %c0_13 = arith.constant 0 : index
    %29 = vector.load %arg2[%c1_11, %c0_12, %c0_13] : memref<3x8x8xf32, #tpu.memory_space<vmem>>, vector<1x8x8xf32>
    %30 = vector.shape_cast %29 : vector<1x8x8xf32> to vector<8x8xf32>
    %cst_14 = arith.constant dense<0.000000e+00> : vector<8x128xf32>
    %31 = tpu.matmul %30, %19, %cst_14 {dimension_numbers = #tpu.dot_dimension_numbers<[1], [0], [0], [1], [0, 0, 1, 1], [], []>} : vector<8x8xf32>, vector<8x128xf32>, vector<8x128xf32> -> vector<8x128xf32>
    %32 = arith.addf %28, %31 : vector<8x128xf32>
    %c2_15 = arith.constant 2 : index
    %c0_16 = arith.constant 0 : index
    %c0_17 = arith.constant 0 : index
    %33 = vector.load %arg2[%c2_15, %c0_16, %c0_17] : memref<3x8x8xf32, #tpu.memory_space<vmem>>, vector<1x8x8xf32>
    %34 = vector.shape_cast %33 : vector<1x8x8xf32> to vector<8x8xf32>
    %cst_18 = arith.constant dense<0.000000e+00> : vector<8x128xf32>
    %35 = tpu.matmul %34, %25, %cst_18 {dimension_numbers = #tpu.dot_dimension_numbers<[1], [0], [0], [1], [0, 0, 1, 1], [], []>} : vector<8x8xf32>, vector<8x128xf32>, vector<8x128xf32> -> vector<8x128xf32>
    %36 = arith.addf %32, %35 : vector<8x128xf32>
    %37 = vector.broadcast %3 : vector<8x1xf32> to vector<8x128xf32>
    %38 = arith.addf %36, %37 : vector<8x128xf32>
    %cst_19 = arith.constant 0.000000e+00 : f32
    %39 = vector.broadcast %cst_19 : f32 to vector<8x128xf32>
    %40 = arith.maximumf %38, %39 : vector<8x128xf32>
    %c1_i32_20 = arith.constant 1 : i32
    %41 = tpu.dynamic_rotate %40 by %c1_i32_20 dim 1 : vector<8x128xf32>, i32 -> vector<8x128xf32>
    %42 = vector.broadcast %9 : vector<1x128xf32> to vector<8x128xf32>
    %43 = arith.mulf %41, %42 : vector<8x128xf32>
    %c127_i32_21 = arith.constant 127 : i32
    %44 = tpu.dynamic_rotate %40 by %c127_i32_21 dim 1 : vector<8x128xf32>, i32 -> vector<8x128xf32>
    %45 = vector.broadcast %13 : vector<1x128xf32> to vector<8x128xf32>
    %46 = arith.mulf %44, %45 : vector<8x128xf32>
    %c0_22 = arith.constant 0 : index
    %c0_23 = arith.constant 0 : index
    %c0_24 = arith.constant 0 : index
    %47 = vector.load %arg3[%c0_22, %c0_23, %c0_24] : memref<3x8x8xf32, #tpu.memory_space<vmem>>, vector<1x8x8xf32>
    %48 = vector.shape_cast %47 : vector<1x8x8xf32> to vector<8x8xf32>
    %cst_25 = arith.constant dense<0.000000e+00> : vector<8x128xf32>
    %49 = tpu.matmul %48, %43, %cst_25 {dimension_numbers = #tpu.dot_dimension_numbers<[1], [0], [0], [1], [0, 0, 1, 1], [], []>} : vector<8x8xf32>, vector<8x128xf32>, vector<8x128xf32> -> vector<8x128xf32>
    %c1_26 = arith.constant 1 : index
    %c0_27 = arith.constant 0 : index
    %c0_28 = arith.constant 0 : index
    %50 = vector.load %arg3[%c1_26, %c0_27, %c0_28] : memref<3x8x8xf32, #tpu.memory_space<vmem>>, vector<1x8x8xf32>
    %51 = vector.shape_cast %50 : vector<1x8x8xf32> to vector<8x8xf32>
    %cst_29 = arith.constant dense<0.000000e+00> : vector<8x128xf32>
    %52 = tpu.matmul %51, %40, %cst_29 {dimension_numbers = #tpu.dot_dimension_numbers<[1], [0], [0], [1], [0, 0, 1, 1], [], []>} : vector<8x8xf32>, vector<8x128xf32>, vector<8x128xf32> -> vector<8x128xf32>
    %53 = arith.addf %49, %52 : vector<8x128xf32>
    %c2_30 = arith.constant 2 : index
    %c0_31 = arith.constant 0 : index
    %c0_32 = arith.constant 0 : index
    %54 = vector.load %arg3[%c2_30, %c0_31, %c0_32] : memref<3x8x8xf32, #tpu.memory_space<vmem>>, vector<1x8x8xf32>
    %55 = vector.shape_cast %54 : vector<1x8x8xf32> to vector<8x8xf32>
    %cst_33 = arith.constant dense<0.000000e+00> : vector<8x128xf32>
    %56 = tpu.matmul %55, %46, %cst_33 {dimension_numbers = #tpu.dot_dimension_numbers<[1], [0], [0], [1], [0, 0, 1, 1], [], []>} : vector<8x8xf32>, vector<8x128xf32>, vector<8x128xf32> -> vector<8x128xf32>
    %57 = arith.addf %53, %56 : vector<8x128xf32>
    %58 = vector.broadcast %4 : vector<8x1xf32> to vector<8x128xf32>
    %59 = arith.addf %57, %58 : vector<8x128xf32>
    %60 = arith.addf %59, %0 : vector<8x128xf32>
    %cst_34 = arith.constant 0.000000e+00 : f32
    %61 = vector.broadcast %cst_34 : f32 to vector<8x128xf32>
    %62 = arith.maximumf %60, %61 : vector<8x128xf32>
    %c0_35 = arith.constant 0 : index
    %c0_36 = arith.constant 0 : index
    %63 = vector.load %arg5[%c0_35, %c0_36] : memref<8x128xf32, #tpu.memory_space<vmem>>, vector<8x128xf32>
    tpu.vector_store %arg5[%c0_35, %c0_36], %62 {strides = array<i32>} : memref<8x128xf32, #tpu.memory_space<vmem>>, vector<8x128xf32>,
    return
  }
  func.func @transform_0(%arg0: i32) -> (i32, i32) {
    %c0_i32 = arith.constant 0 : i32
    %c0_i32_0 = arith.constant 0 : i32
    return %arg0, %c0_i32 : i32, i32
  }
  func.func @transform_1(%arg0: i32) -> (i32, i32, i32) {
    %c0_i32 = arith.constant 0 : i32
    %c0_i32_0 = arith.constant 0 : i32
    %c0_i32_1 = arith.constant 0 : i32
    %c0_i32_2 = arith.constant 0 : i32
    return %c0_i32, %c0_i32_0, %c0_i32_1 : i32, i32, i32
  }
  func.func @transform_2(%arg0: i32) -> (i32, i32, i32) {
    %c0_i32 = arith.constant 0 : i32
    %c0_i32_0 = arith.constant 0 : i32
    %c0_i32_1 = arith.constant 0 : i32
    %c0_i32_2 = arith.constant 0 : i32
    return %c0_i32, %c0_i32_0, %c0_i32_1 : i32, i32, i32
  }
  func.func @transform_3(%arg0: i32) -> (i32, i32) {
    %c0_i32 = arith.constant 0 : i32
    %c0_i32_0 = arith.constant 0 : i32
    %c0_i32_1 = arith.constant 0 : i32
    return %c0_i32, %c0_i32_0 : i32, i32
  }
  func.func @transform_4(%arg0: i32) -> (i32, i32) {
    %c0_i32 = arith.constant 0 : i32
    %c0_i32_0 = arith.constant 0 : i32
    return %arg0, %c0_i32 : i32, i32
  }
}

</mosaic_0001>

<llo_original>
// kernel: tpu_custom_call.1
$region0: #{tpu_custom_call.1}
  #allocation0 [shape = 'u32[]', space=smem, size = 0x4, offset = 0x4, fixed_abs, tag = 'smem constant byte address 0x4 - core index']
  #allocation1 [shape = 'u32[72,128]{1,0:T(1,128)}', space=vmem, size = 0x9000, scoped, tag = 'internal scratch']
  %s0 = inlined_call_operand.hbm [shape: f32[16,128], index: 0, kind: input, shape index: {}]
  %s1 = inlined_call_operand.hbm [shape: f32[3,8,8], index: 1, kind: input, shape index: {}]
  %s2 = inlined_call_operand.hbm [shape: f32[3,8,8], index: 2, kind: input, shape index: {}]
  %s3 = inlined_call_operand.vmem [shape: f32[8,4], index: 3, kind: input, shape index: {}]
  %s4 = inlined_call_operand.hbm [shape: f32[16,128], index: 4, kind: output, shape index: {}]
  %s5 = sld [smem:[#allocation0]]
  $region61: #{tpu_custom_call.1} parent=0
    _
  %s7 = ssub.s32 1, %s5
  %s8 = scalar_select 0, %s7, %s5
  $region1: #{tpu_custom_call.1} parent=0
    #allocation2 [shape = 'u8[8192]{0}', space=vmem, size = 0x2000, scoped, tag = 'input window, operand 0']
    #allocation3 [shape = 's32[2]{0}', space=sflag, size = 0x8, scoped, tag = 'scoped memory for tpu_custom_call.1']
    #allocation4 [shape = 's32[2]{0}', space=sflag, size = 0x8, scoped, tag = 'scoped memory for tpu_custom_call.1']
    #allocation5 [shape = 'u8[12288]{0}', space=vmem, size = 0x3000, scoped, tag = 'input window, operand 1, single buffered']
    #allocation6 [shape = 's32[1]{0}', space=sflag, size = 0x4, scoped, tag = 'scoped memory for tpu_custom_call.1']
    #allocation7 [shape = 'u8[12288]{0}', space=vmem, size = 0x3000, scoped, tag = 'input window, operand 2, single buffered']
    #allocation8 [shape = 'u8[8192]{0}', space=vmem, size = 0x2000, scoped, tag = 'output window, operand 0']
    %9 = vsyncpa [#allocation3], 0
    %s10 = scalar_lea.sflag [#allocation3], 1
    %11 = vsyncpa %s10, 0
    %12 = vsyncpa [#allocation6], 0
    %13 = vsyncpa [#allocation4], 0
    %s14 = scalar_lea.sflag [#allocation4], 1
    %15 = vsyncpa %s14, 0
    loop: start=0, step=1, limit=4
    $region2: #{tpu_custom_call.1} parent=1 // loop_pre_header
      _
    $region3: #{tpu_custom_call.1} parent=1 // loop_header
      %s17 = sphi 0, %s21
      %p18 = scmp.ge.s32.totalorder %s17, 4
      %s27 = sphi 0, %s29
      %s30 = sphi 0, %s27
      %s31 = sphi 0, %s30
      %s47 = sphi 0, %s31
      %s51 = sphi 0, %s51
      %s53 = sphi 0, %s51
      %s54 = sphi 0, %s53
      %s68 = sphi 0, %s54
      %s72 = sphi 0, %s72
      %s74 = sphi 0, %s72
      %s75 = sphi 0, %s74
      %s89 = sphi 0, %s75
      %s93 = sphi 0, %s93
      %s95 = sphi 0, %s93
      %s96 = sphi 0, %s95
      %s110 = sphi 0, %s96
      %s116 = sphi 0, %s118
      %s119 = sphi 0, %s116
      %s120 = sphi 0, %s119
      %s136 = sphi 0, %s120
    $region4: #{tpu_custom_call.1} parent=1 // loop_header_branch
      %20 = sbr.rel (%p18) target = $region8
    $region5: #{tpu_custom_call.1} parent=1 // loop_body
      %s22 = ssub.s32 %s17, 1
      %s23 = ssub.s32 %s17, 2
      %s24 = sadd.s32 %s17, 1
      %s25 = ssub.s32 %s17, %s24
      %p26 = scmp.eq.s32.totalorder %s25, 0
      %s28 = sadd.s32 %s27, 1
      %s29 = scalar_select %p26, %s27, %s28
      %p32 = pneg %p26
      %p33 = scmp.eq.s32.totalorder %s17, 1
      %p34 = por %p32, %p33
      %p35 = scmp.ne.s32.totalorder %s27, %s30
      %p36 = scmp.eq.s32.totalorder %s17, 0
      %p37 = por %p35, %p36
      %p38 = scmp.ne.s32.totalorder %s27, %s30
      %p39 = scmp.eq.s32.totalorder %s22, 1
      %p40 = por %p38, %p39
      %p41 = scmp.ne.s32.totalorder %s30, %s31
      %p42 = scmp.eq.s32.totalorder %s22, 0
      %p43 = por %p41, %p42
      %p44 = scmp.ne.s32.totalorder %s30, %s31
      %p45 = scmp.eq.s32.totalorder %s23, 1
      %p46 = por %p44, %p45
      %p48 = scmp.ne.s32.totalorder %s31, %s47
      %p49 = scmp.eq.s32.totalorder %s23, 0
      %p50 = por %p48, %p49
      %s52 = sadd.s32 %s51, 1
      %p55 = scmp.eq.s32.totalorder %s17, 1
      %p56 = scmp.ne.s32.totalorder %s51, %s53
      %p57 = scmp.eq.s32.totalorder %s17, 0
      %p58 = por %p56, %p57
      %p59 = scmp.ne.s32.totalorder %s51, %s53
      %p60 = scmp.eq.s32.totalorder %s22, 1
      %p61 = por %p59, %p60
      %p62 = scmp.ne.s32.totalorder %s53, %s54
      %p63 = scmp.eq.s32.totalorder %s22, 0
      %p64 = por %p62, %p63
      %p65 = scmp.ne.s32.totalorder %s53, %s54
      %p66 = scmp.eq.s32.totalorder %s23, 1
      %p67 = por %p65, %p66
      %p69 = scmp.ne.s32.totalorder %s54, %s68
      %p70 = scmp.eq.s32.totalorder %s23, 0
      %p71 = por %p69, %p70
      %s73 = sadd.s32 %s72, 1
      %p76 = scmp.eq.s32.totalorder %s17, 1
      %p77 = scmp.ne.s32.totalorder %s72, %s74
      %p78 = scmp.eq.s32.totalorder %s17, 0
      %p79 = por %p77, %p78
      %p80 = scmp.ne.s32.totalorder %s72, %s74
      %p81 = scmp.eq.s32.totalorder %s22, 1
      %p82 = por %p80, %p81
      %p83 = scmp.ne.s32.totalorder %s74, %s75
      %p84 = scmp.eq.s32.totalorder %s22, 0
      %p85 = por %p83, %p84
      %p86 = scmp.ne.s32.totalorder %s74, %s75
      %p87 = scmp.eq.s32.totalorder %s23, 1
      %p88 = por %p86, %p87
      %p90 = scmp.ne.s32.totalorder %s75, %s89
      %p91 = scmp.eq.s32.totalorder %s23, 0
      %p92 = por %p90, %p91
      %s94 = sadd.s32 %s93, 1
      %p97 = scmp.eq.s32.totalorder %s17, 1
      %p98 = scmp.ne.s32.totalorder %s93, %s95
      %p99 = scmp.eq.s32.totalorder %s17, 0
      %p100 = por %p98, %p99
      %p101 = scmp.ne.s32.totalorder %s93, %s95
      %p102 = scmp.eq.s32.totalorder %s22, 1
      %p103 = por %p101, %p102
      %p104 = scmp.ne.s32.totalorder %s95, %s96
      %p105 = scmp.eq.s32.totalorder %s22, 0
      %p106 = por %p104, %p105
      %p107 = scmp.ne.s32.totalorder %s95, %s96
      %p108 = scmp.eq.s32.totalorder %s23, 1
      %p109 = por %p107, %p108
      %p111 = scmp.ne.s32.totalorder %s96, %s110
      %p112 = scmp.eq.s32.totalorder %s23, 0
      %p113 = por %p111, %p112
      %s114 = ssub.s32 %s17, %s24
      %p115 = scmp.eq.s32.totalorder %s114, 0
      %s117 = sadd.s32 %s116, 1
      %s118 = scalar_select %p115, %s116, %s117
      %p121 = pneg %p115
      %p122 = scmp.eq.s32.totalorder %s17, 1
      %p123 = por %p121, %p122
      %p124 = scmp.ne.s32.totalorder %s116, %s119
      %p125 = scmp.eq.s32.totalorder %s17, 0
      %p126 = por %p124, %p125
      %p127 = scmp.ne.s32.totalorder %s116, %s119
      %p128 = scmp.eq.s32.totalorder %s22, 1
      %p129 = por %p127, %p128
      %p130 = scmp.ne.s32.totalorder %s119, %s120
      %p131 = scmp.eq.s32.totalorder %s22, 0
      %p132 = por %p130, %p131
      %p133 = scmp.ne.s32.totalorder %s119, %s120
      %p134 = scmp.eq.s32.totalorder %s23, 1
      %p135 = por %p133, %p134
      %p137 = scmp.ne.s32.totalorder %s120, %s136
      %p138 = scmp.eq.s32.totalorder %s23, 0
      %p139 = por %p137, %p138
      %p140 = scmp.le.s32.totalorder 1, %s17
      %p141 = scmp.lt.s32.totalorder %s17, 3
      %p142 = pnand %p140, %p141
      %p143 = pneg %p142
      // Predicated region
      $region9: #{tpu_custom_call.1} parent=5 // pred_check
        _
      $region10: #{tpu_custom_call.1} parent=5 // pred_check_branch
        %145 = sbr.rel (%p142) target = $region12
      $region11: #{tpu_custom_call.1} parent=5 // pred_region
        %s146 = ssub.s32 %s17, 1
        // Predicated region
        $region13: #{tpu_custom_call.1} parent=11 // pred_check
          %p147 = pneg %p64
        $region14: #{tpu_custom_call.1} parent=11 // pred_check_branch
          %149 = sbr.rel (%p147) target = $region16
        $region15: #{tpu_custom_call.1} parent=11 // pred_region
          %151 = vsyncadd [#allocation6], 0
          %s152 = sshll.u32 %s1, 4
          %s153 = int_to_ptr.hbm [resolvable:$true] %s152
          %s154 = sshll.u32 [#allocation5], 4
          %s155 = int_to_ptr.vmem [resolvable:$true] %s154
          %160 = dma.hbm_to_vmem [thread:$0]  %s153, 384, %s155, [#allocation6], 128, 128, 8
        $region16: #{tpu_custom_call.1} parent=11 // pred_fallthru
          _
        // Predicated region
        $region17: #{tpu_custom_call.1} parent=11 // pred_check
          %p161 = pneg %p85
        $region18: #{tpu_custom_call.1} parent=11 // pred_check_branch
          %163 = sbr.rel (%p161) target = $region20
        $region19: #{tpu_custom_call.1} parent=11 // pred_region
          %165 = vsyncadd [#allocation6], 0
          %s166 = sshll.u32 %s2, 4
          %s167 = int_to_ptr.hbm [resolvable:$true] %s166
          %s168 = sshll.u32 [#allocation7], 4
          %s169 = int_to_ptr.vmem [resolvable:$true] %s168
          %174 = dma.hbm_to_vmem [thread:$0]  %s167, 384, %s169, [#allocation6], 128, 128, 8
        $region20: #{tpu_custom_call.1} parent=11 // pred_fallthru
          _
        // Predicated region
        $region21: #{tpu_custom_call.1} parent=11 // pred_check
          %p175 = pneg %p106
        $region22: #{tpu_custom_call.1} parent=11 // pred_check_branch
          %177 = sbr.rel (%p175) target = $region24
        $region23: #{tpu_custom_call.1} parent=11 // pred_region
          _
        $region24: #{tpu_custom_call.1} parent=11 // pred_fallthru
          _
      $region12: #{tpu_custom_call.1} parent=5 // pred_fallthru
        _
      %p178 = scmp.lt.s32.totalorder %s17, 2
      // Predicated region
      $region25: #{tpu_custom_call.1} parent=5 // pred_check
        %p179 = pneg %p178
      $region26: #{tpu_custom_call.1} parent=5 // pred_check_branch
        %181 = sbr.rel (%p179) target = $region28
      $region27: #{tpu_custom_call.1} parent=5 // pred_region
        // Predicated region
        $region29: #{tpu_custom_call.1} parent=27 // pred_check
          %p182 = pneg %p37
        $region30: #{tpu_custom_call.1} parent=27 // pred_check_branch
          %184 = sbr.rel (%p182) target = $region32
        $region31: #{tpu_custom_call.1} parent=27 // pred_region
          %s185 = sand.u32 %s27, 1
          %s186 = scalar_lea.sflag [#allocation3], %s185
          %s187 = sand.u32 %s27, 1
          %s188 = smul.addr %s187, 8
          %s189 = scalar_lea.vmem [#allocation2], %s188
          %191 = vsyncadd %s186, 0
          %s192 = smul.addr %s17, 8
          %s193 = scalar_lea.hbm %s0, %s192
          %s195 = sshll.u32 %s193, 4
          %s196 = int_to_ptr.hbm [resolvable:$true] %s195
          %s197 = sshll.u32 %s189, 4
          %s198 = int_to_ptr.vmem [resolvable:$true] %s197
          %200 = dma.hbm_to_vmem [thread:$0]  %s196, 128, %s198, %s186
        $region32: #{tpu_custom_call.1} parent=27 // pred_fallthru
          _
      $region28: #{tpu_custom_call.1} parent=5 // pred_fallthru
        _
      %p201 = scmp.le.s32.totalorder 1, %s17
      %p202 = scmp.lt.s32.totalorder %s17, 3
      %p203 = pnand %p201, %p202
      %p204 = pneg %p203
      // Predicated region
      $region33: #{tpu_custom_call.1} parent=5 // pred_check
        _
      $region34: #{tpu_custom_call.1} parent=5 // pred_check_branch
        %206 = sbr.rel (%p203) target = $region36
      $region35: #{tpu_custom_call.1} parent=5 // pred_region
        %s207 = ssub.s32 %s17, 1
        %s208 = sand.u32 %s30, 1
        %s209 = scalar_lea.sflag [#allocation3], %s208
        %s210 = sand.u32 %s30, 1
        %s211 = smul.addr %s210, 8
        %s212 = scalar_lea.vmem [#allocation2], %s211
        // Predicated region
        $region37: #{tpu_custom_call.1} parent=35 // pred_check
          %p213 = pneg %p43
        $region38: #{tpu_custom_call.1} parent=35 // pred_check_branch
          %215 = sbr.rel (%p213) target = $region40
        $region39: #{tpu_custom_call.1} parent=35 // pred_region
          %217 = dma.done %s209, 128
        $region40: #{tpu_custom_call.1} parent=35 // pred_fallthru
          _
        // Predicated region
        $region41: #{tpu_custom_call.1} parent=35 // pred_check
          %p218 = pneg %p64
        $region42: #{tpu_custom_call.1} parent=35 // pred_check_branch
          %220 = sbr.rel (%p218) target = $region44
        $region43: #{tpu_custom_call.1} parent=35 // pred_region
          %222 = dma.done [#allocation6], 384
        $region44: #{tpu_custom_call.1} parent=35 // pred_fallthru
          _
        // Predicated region
        $region45: #{tpu_custom_call.1} parent=35 // pred_check
          %p223 = pneg %p85
        $region46: #{tpu_custom_call.1} parent=35 // pred_check_branch
          %225 = sbr.rel (%p223) target = $region48
        $region47: #{tpu_custom_call.1} parent=35 // pred_region
          %227 = dma.done [#allocation6], 384
        $region48: #{tpu_custom_call.1} parent=35 // pred_fallthru
          _
        %s228 = sand.u32 %s30, 1
        %s229 = scalar_lea.sflag [#allocation3], %s228
        %s230 = sand.u32 %s30, 1
        %s231 = smul.addr %s230, 8
        %s232 = scalar_lea.vmem [#allocation2], %s231
        %p233 = pneg %p43
        %p234 = pneg %p40
        %p235 = pneg %p64
        %p236 = pneg %p61
        %p237 = pneg %p85
        %p238 = pneg %p82
        %p239 = pneg %p106
        %p240 = pneg %p103
        %p241 = pneg %p132
        %p242 = pneg %p129
        %s243 = sand.u32 %s119, 1
        %s244 = scalar_lea.sflag [#allocation4], %s243
        %s245 = sand.u32 %s119, 1
        %s246 = smul.addr %s245, 8
        %s247 = scalar_lea.vmem [#allocation8], %s246
        %v248 = vld [vmem:[%s212] sm:$0xff]
        %v249 = vld [vmem:[%s3] sm:$0xff]
        %v250 = vlaneseq
        %v251 = vand.u32 %v250, 127
        %vm252 = vcmp.ne.s32.totalorder %v251, 0
        %v253 = vsel %vm252, 1, 0
        %v254 = vcvt.s32.f32 %v253
        %vm255 = vcmp.ne.s32.totalorder %v251, 127
        %v256 = vsel %vm255, 1, 0
        %v257 = vcvt.s32.f32 %v256
        %259 = vset.pattern.permute.xlu0 0
        %260 = vperm.xlu0 %259, %v249
        %v261 = vpop.permute.xlu0 %260
        %v263 = vmul.f32 %v248, %v261
        %264 = vset.pattern.permute.xlu0 1
        %265 = vperm.xlu0 %264, %v249
        %v266 = vpop.permute.xlu0 %265
        %v268 = vadd.f32 %v263, %v266
        %v269 = vmax.f32 %v268, 0.0
        %270 = vrot.lane.b32.xlu0 %v269, 1
        %v271 = vpop.permute.xlu0 %270
        %v272 = vmul.f32 %v271, %v254
        %273 = vrot.lane.b32.xlu0 %v269, 127
        %v274 = vpop.permute.xlu0 %273
        %v275 = vmul.f32 %v274, %v257
        %v276 = vld [vmem:[#allocation5] sm:$0xff]
        %s277 = scalar_lea.vmem [#allocation5], 8
        %v278 = vld [vmem:[%s277] sm:$0xff]
        %vm279 = vcmask 64512
        %v281 = vsel %vm279, %v278, 0
        %283 = vmatpush.msra.mxu0 0.0
        %284 = vmatpush.msra.mxu0 0.0
        %285 = vmatpush.msra.mxu0 0.0
        %286 = vmatpush.msra.mxu0 0.0
        %287 = vmatpush.msra.mxu0 0.0
        %288 = vmatpush.msra.mxu0 0.0
        %289 = vmatpush.msra.mxu0 0.0
        %290 = vmatpush.msra.mxu0 0.0
        %291 = vmatpush.msra.mxu0 0.0
        %292 = vmatpush.msra.mxu0 0.0
        %293 = vmatpush.msra.mxu0 0.0
        %294 = vmatpush.msra.mxu0 0.0
        %295 = vmatpush.msra.mxu0 0.0
        %296 = vmatpush.msra.mxu0 0.0
        %297 = vmatpush.msra.mxu0 0.0
        %298 = vmatpush.msra.mxu0 %v269
        %299 = vmatmul.f32.gmra.mxu0 %v281
        %v300 = vpop.f32.mrf.mxu0
        %v301 = vadd.f32 0.0, %v300
        %302 = vdwg.mxu0
        %v304 = vsel %vm279, %v276, 0
        %306 = vmatpush.msra.mxu0 0.0
        %307 = vmatpush.msra.mxu0 0.0
        %308 = vmatpush.msra.mxu0 0.0
        %309 = vmatpush.msra.mxu0 0.0
        %310 = vmatpush.msra.mxu0 0.0
        %311 = vmatpush.msra.mxu0 0.0
        %312 = vmatpush.msra.mxu0 0.0
        %313 = vmatpush.msra.mxu0 0.0
        %314 = vmatpush.msra.mxu0 0.0
        %315 = vmatpush.msra.mxu0 0.0
        %316 = vmatpush.msra.mxu0 0.0
        %317 = vmatpush.msra.mxu0 0.0
        %318 = vmatpush.msra.mxu0 0.0
        %319 = vmatpush.msra.mxu0 0.0
        %320 = vmatpush.msra.mxu0 0.0
        %321 = vmatpush.msra.mxu0 %v272
        %322 = vmatmul.f32.gmra.mxu0 %v304
        %v323 = vpop.f32.mrf.mxu0
        %v324 = vadd.f32 %v301, %v323
        %325 = vdwg.mxu0
        %s326 = scalar_lea.vmem [#allocation5], 16
        %v327 = vld [vmem:[%s326] sm:$0xff]
        %v329 = vsel %vm279, %v327, 0
        %331 = vmatpush.msra.mxu0 0.0
        %332 = vmatpush.msra.mxu0 0.0
        %333 = vmatpush.msra.mxu0 0.0
        %334 = vmatpush.msra.mxu0 0.0
        %335 = vmatpush.msra.mxu0 0.0
        %336 = vmatpush.msra.mxu0 0.0
        %337 = vmatpush.msra.mxu0 0.0
        %338 = vmatpush.msra.mxu0 0.0
        %339 = vmatpush.msra.mxu0 0.0
        %340 = vmatpush.msra.mxu0 0.0
        %341 = vmatpush.msra.mxu0 0.0
        %342 = vmatpush.msra.mxu0 0.0
        %343 = vmatpush.msra.mxu0 0.0
        %344 = vmatpush.msra.mxu0 0.0
        %345 = vmatpush.msra.mxu0 0.0
        %346 = vmatpush.msra.mxu0 %v275
        %347 = vmatmul.f32.gmra.mxu0 %v329
        %v348 = vpop.f32.mrf.mxu0
        %v349 = vadd.f32 0.0, %v348
        %350 = vdwg.mxu0
        %v351 = vadd.f32 %v324, %v349
        %352 = vset.pattern.permute.xlu0 2
        %353 = vperm.xlu0 %352, %v249
        %v354 = vpop.permute.xlu0 %353
        %v356 = vadd.f32 %v351, %v354
        %v357 = vmax.f32 %v356, 0.0
        %358 = vrot.lane.b32.xlu0 %v357, 1
        %v359 = vpop.permute.xlu0 %358
        %v360 = vmul.f32 %v359, %v254
        %361 = vrot.lane.b32.xlu0 %v357, 127
        %v362 = vpop.permute.xlu0 %361
        %v363 = vmul.f32 %v362, %v257
        %v364 = vld [vmem:[#allocation7] sm:$0xff]
        %s365 = scalar_lea.vmem [#allocation7], 8
        %v366 = vld [vmem:[%s365] sm:$0xff]
        %v368 = vsel %vm279, %v366, 0
        %370 = vmatpush.msra.mxu0 0.0
        %371 = vmatpush.msra.mxu0 0.0
        %372 = vmatpush.msra.mxu0 0.0
        %373 = vmatpush.msra.mxu0 0.0
        %374 = vmatpush.msra.mxu0 0.0
        %375 = vmatpush.msra.mxu0 0.0
        %376 = vmatpush.msra.mxu0 0.0
        %377 = vmatpush.msra.mxu0 0.0
        %378 = vmatpush.msra.mxu0 0.0
        %379 = vmatpush.msra.mxu0 0.0
        %380 = vmatpush.msra.mxu0 0.0
        %381 = vmatpush.msra.mxu0 0.0
        %382 = vmatpush.msra.mxu0 0.0
        %383 = vmatpush.msra.mxu0 0.0
        %384 = vmatpush.msra.mxu0 0.0
        %385 = vmatpush.msra.mxu0 %v357
        %386 = vmatmul.f32.gmra.mxu0 %v368
        %v387 = vpop.f32.mrf.mxu0
        %v388 = vadd.f32 0.0, %v387
        %389 = vdwg.mxu0
        %v391 = vsel %vm279, %v364, 0
        %393 = vmatpush.msra.mxu0 0.0
        %394 = vmatpush.msra.mxu0 0.0
        %395 = vmatpush.msra.mxu0 0.0
        %396 = vmatpush.msra.mxu0 0.0
        %397 = vmatpush.msra.mxu0 0.0
        %398 = vmatpush.msra.mxu0 0.0
        %399 = vmatpush.msra.mxu0 0.0
        %400 = vmatpush.msra.mxu0 0.0
        %401 = vmatpush.msra.mxu0 0.0
        %402 = vmatpush.msra.mxu0 0.0
        %403 = vmatpush.msra.mxu0 0.0
        %404 = vmatpush.msra.mxu0 0.0
        %405 = vmatpush.msra.mxu0 0.0
        %406 = vmatpush.msra.mxu0 0.0
        %407 = vmatpush.msra.mxu0 0.0
        %408 = vmatpush.msra.mxu0 %v360
        %409 = vmatmul.f32.gmra.mxu0 %v391
        %v410 = vpop.f32.mrf.mxu0
        %v411 = vadd.f32 %v388, %v410
        %412 = vdwg.mxu0
        %s413 = scalar_lea.vmem [#allocation7], 16
        %v414 = vld [vmem:[%s413] sm:$0xff]
        %v416 = vsel %vm279, %v414, 0
        %418 = vmatpush.msra.mxu0 0.0
        %419 = vmatpush.msra.mxu0 0.0
        %420 = vmatpush.msra.mxu0 0.0
        %421 = vmatpush.msra.mxu0 0.0
        %422 = vmatpush.msra.mxu0 0.0
        %423 = vmatpush.msra.mxu0 0.0
        %424 = vmatpush.msra.mxu0 0.0
        %425 = vmatpush.msra.mxu0 0.0
        %426 = vmatpush.msra.mxu0 0.0
        %427 = vmatpush.msra.mxu0 0.0
        %428 = vmatpush.msra.mxu0 0.0
        %429 = vmatpush.msra.mxu0 0.0
        %430 = vmatpush.msra.mxu0 0.0
        %431 = vmatpush.msra.mxu0 0.0
        %432 = vmatpush.msra.mxu0 0.0
        %433 = vmatpush.msra.mxu0 %v363
        %434 = vmatmul.f32.gmra.mxu0 %v416
        %v435 = vpop.f32.mrf.mxu0
        %v436 = vadd.f32 0.0, %v435
        %437 = vdwg.mxu0
        %v438 = vadd.f32 %v411, %v436
        %439 = vset.pattern.permute.xlu0 3
        %440 = vperm.xlu0 %439, %v249
        %v441 = vpop.permute.xlu0 %440
        %v443 = vadd.f32 %v438, %v441
        %v444 = vadd.f32 %v443, %v248
        %v445 = vmax.f32 %v444, 0.0
        %446 = vst [vmem:[%s247] sm:$0xff] %v445
        %s447 = sand.u32 %s119, 1
        %s448 = scalar_lea.sflag [#allocation4], %s447
        %s449 = sand.u32 %s119, 1
        %s450 = smul.addr %s449, 8
        %s451 = scalar_lea.vmem [#allocation8], %s450
        // Predicated region
        $region49: #{tpu_custom_call.1} parent=35 // pred_check
          %p452 = pneg %p129
        $region50: #{tpu_custom_call.1} parent=35 // pred_check_branch
          %454 = sbr.rel (%p452) target = $region52
        $region51: #{tpu_custom_call.1} parent=35 // pred_region
          %456 = vsyncadd %s448, 0
          %s457 = smul.addr %s22, 8
          %s458 = scalar_lea.hbm %s4, %s457
          %s460 = sshll.u32 %s451, 4
          %s461 = int_to_ptr.vmem [resolvable:$true] %s460
          %s462 = sshll.u32 %s458, 4
          %s463 = int_to_ptr.hbm [resolvable:$true] %s462
          %465 = dma.vmem_to_hbm [thread:$0]  %s461, 128, %s463, %s448
        $region52: #{tpu_custom_call.1} parent=35 // pred_fallthru
          _
      $region36: #{tpu_custom_call.1} parent=5 // pred_fallthru
        _
      %p466 = scmp.le.s32.totalorder 2, %s17
      // Predicated region
      $region53: #{tpu_custom_call.1} parent=5 // pred_check
        %p467 = pneg %p466
      $region54: #{tpu_custom_call.1} parent=5 // pred_check_branch
        %469 = sbr.rel (%p467) target = $region56
      $region55: #{tpu_custom_call.1} parent=5 // pred_region
        %s470 = ssub.s32 %s17, 2
        // Predicated region
        $region57: #{tpu_custom_call.1} parent=55 // pred_check
          %p471 = pneg %p135
        $region58: #{tpu_custom_call.1} parent=55 // pred_check_branch
          %473 = sbr.rel (%p471) target = $region60
        $region59: #{tpu_custom_call.1} parent=55 // pred_region
          %s474 = sand.u32 %s120, 1
          %s475 = scalar_lea.sflag [#allocation4], %s474
          %s476 = sand.u32 %s120, 1
          %s477 = smul.addr %s476, 8
          %s478 = scalar_lea.vmem [#allocation8], %s477
          %480 = dma.done %s475, 128
        $region60: #{tpu_custom_call.1} parent=55 // pred_fallthru
          _
      $region56: #{tpu_custom_call.1} parent=5 // pred_fallthru
        _
    $region6: #{tpu_custom_call.1} parent=1 // loop_footer
      %s21 = sadd.s32 1, %s17
    $region7: #{tpu_custom_call.1} parent=1 // loop_footer_branch
      %16 = sbr.rel target = $region3
    $region8: #{tpu_custom_call.1} parent=1 // loop_exit
      _
    %481 = vsyncpa [#allocation3], 1
    %s482 = scalar_lea.sflag [#allocation3], 1
    %483 = vsyncpa %s482, 1
    %484 = vsyncpa [#allocation6], 1
    %485 = vsyncpa [#allocation4], 1
    %s486 = scalar_lea.sflag [#allocation4], 1
    %487 = vsyncpa %s486, 1

</llo_original>
